<compile_context>
chip_gen: v6e
topology: v6e:2x2x1
jax: 0.10.0
libtpu: 0.0.40
codegen_flags: <defaults>
</compile_context>

<pallas_src>
import jax
import jax.numpy as jnp
from jax.experimental import pallas as pl
from jax.experimental.pallas import tpu as pltpu


def _critic_kernel(st_ref, at_ref,            # (S, TB), (A, TB)  activations
                   w1t_ref, b1_ref,           # (4H, S), (4H, 1)
                   w2t_ref, b2_ref,           # (H, 4H), (H, 1)
                   vst_ref, vat_ref, bf_ref,  # (1, H), (1, A), (1, 1) folded tail
                   out_ref):                  # (1, TB)
    f32 = jnp.float32

    # ---- state path (transposed: features x batch, batch on lanes) ----
    h = jnp.dot(w1t_ref[...], st_ref[...], preferred_element_type=f32)
    h = jnp.maximum(h + b1_ref[...], 0.0)                       # bias+ReLU in f32
    h = jnp.dot(w2t_ref[...], h.astype(w2t_ref.dtype),
                preferred_element_type=f32)
    h = jnp.maximum(h + b2_ref[...], 0.0)

    # ---- action path ReLU (applied to raw action, as in the module) ----
    a = jnp.maximum(at_ref[...].astype(f32), 0.0)

    # ---- folded linear tail: two thin contractions + scalar bias ----
    q = (jnp.dot(vst_ref[...], h.astype(vst_ref.dtype), preferred_element_type=f32)
         + jnp.dot(vat_ref[...], a.astype(vat_ref.dtype), preferred_element_type=f32)
         + bf_ref[...])                                         # (1, TB), lane-dense

    out_ref[...] = q.astype(out_ref.dtype)


def critic_forward(state, action, params, *, block_b=256,
                   compute_dtype=jnp.float32):
    """Fused Critic forward. state: (B, S), action: (B, A) -> (B, 1)."""
    assert block_b % 128 == 0, "batch tile must be a multiple of 128 lanes"
    B, S = state.shape
    A = action.shape[1]
    (w1, b1, w2, b2, w3, b3, wa, ba, wc1, bc1, wc2, bc2) = params
    H4 = w1.shape[1]          # 4 * hidden_dim
    H = w2.shape[1]           # hidden_dim
    half = w3.shape[1]        # hidden_dim // 2

    # ---- fold the all-linear tail in f32 (wrapper side) ----
    wc1_s = wc1[:half, :]                          # applies to state_out
    wc1_a = wc1[half:, :]                          # applies to action_out
    vs = w3 @ wc1_s @ wc2                          # (H, 1)
    va = wa @ wc1_a @ wc2                          # (A, 1)
    b_fold = (b3 @ wc1_s + ba @ wc1_a + bc1) @ wc2 + bc2   # (1,)

    # ---- batch tiling (batch on lanes) ----
    TB = block_b
    num_tiles = pl.cdiv(B, TB)
    B_pad = num_tiles * TB

    st = jnp.pad(state.T, ((0, 0), (0, B_pad - B))).astype(compute_dtype)   # (S, B_pad)
    at = jnp.pad(action.T, ((0, 0), (0, B_pad - B))).astype(compute_dtype)  # (A, B_pad)

    args = (
        st, at,
        w1.T.astype(compute_dtype), b1.reshape(-1, 1).astype(jnp.float32),
        w2.T.astype(compute_dtype), b2.reshape(-1, 1).astype(jnp.float32),
        vs.T.astype(compute_dtype), va.T.astype(compute_dtype),
        b_fold.reshape(1, 1).astype(jnp.float32),
    )

    const = lambda i: (0, 0)   # weights/biases: resident across grid steps
    in_specs = [
        pl.BlockSpec((S, TB), lambda i: (0, i)),   # state_T   (streamed)
        pl.BlockSpec((A, TB), lambda i: (0, i)),   # action_T  (streamed)
        pl.BlockSpec((H4, S), const),              # w1_T
        pl.BlockSpec((H4, 1), const),              # b1
        pl.BlockSpec((H, H4), const),              # w2_T
        pl.BlockSpec((H, 1), const),               # b2
        pl.BlockSpec((1, H), const),               # vs_T (folded)
        pl.BlockSpec((1, A), const),               # va_T (folded)
        pl.BlockSpec((1, 1), const),               # folded scalar bias
    ]

    out = pl.pallas_call(
        _critic_kernel,
        out_shape=jax.ShapeDtypeStruct((1, B_pad), jnp.float32),
        grid=(num_tiles,),
        in_specs=in_specs,
        out_specs=pl.BlockSpec((1, TB), lambda i: (0, i)),       # lane-dense Q row
        compiler_params=pltpu.CompilerParams(
            dimension_semantics=("parallel",)),                  # megacore on v7x
    )(*args)

    return out[:, :B].T            # back to (B, 1) to match the PyTorch module


def init_critic_params(key, state_dim, action_dim, hidden_dim=16):
    """Deterministic synthetic parameters (same shapes as the PyTorch module)."""
    dims = [
        (state_dim, 4 * hidden_dim),       # state_path.0
        (4 * hidden_dim, hidden_dim),      # state_path.2
        (hidden_dim, hidden_dim // 2),     # state_path.4
        (action_dim, hidden_dim // 2),     # action_path.1
        (hidden_dim, hidden_dim // 4),     # common_path.0
        (hidden_dim // 4, 1),              # common_path.1
    ]
    params = []
    for (din, dout) in dims:
        key, wk = jax.random.split(key)
        w = (jax.random.normal(wk, (din, dout), dtype=jnp.float32)
             * (1.0 / jnp.sqrt(jnp.float32(din))))
        b = jnp.zeros((dout,), dtype=jnp.float32)
        params.extend([w, b])
    return tuple(params)


def critic_reference(state, action, params):
    """Pure-JAX reference mirroring the PyTorch forward exactly."""
    (w1, b1, w2, b2, w3, b3, wa, ba, wc1, bc1, wc2, bc2) = params
    h = jax.nn.relu(state @ w1 + b1)
    h = jax.nn.relu(h @ w2 + b2)
    state_out = h @ w3 + b3
    action_out = jax.nn.relu(action) @ wa + ba
    combined = jnp.concatenate([state_out, action_out], axis=1)
    c = combined @ wc1 + bc1
    return c @ wc2 + bc2


if __name__ == "__main__":
    B, state_dim, action_dim, hidden_dim = 512, 8, 4, 16

    key = jax.random.PRNGKey(0)
    pkey, skey, akey = jax.random.split(key, 3)

    params = init_critic_params(pkey, state_dim, action_dim, hidden_dim)
    state = jax.random.normal(skey, (B, state_dim), dtype=jnp.float32)
    action = jax.random.normal(akey, (B, action_dim), dtype=jnp.float32)

    out = critic_forward(state, action, params, block_b=256)   # grid=(2,)
    out = jax.block_until_ready(out)

    ref = critic_reference(state, action, params)
    assert out.shape == (B, 1), out.shape
    # Weight folding changes f32 summation order vs the reference (~1e-6).
    assert jnp.allclose(out, ref, atol=1e-4, rtol=1e-4), (
        "mismatch vs reference", out, ref)

    print("KERNEL_OK")
</pallas_src>

<mosaic_0001>
module attributes {stable_mosaic.version = 11 : i64} {
  func.func @_critic_kernel(%arg0: i32, %arg1: memref<8x256xf32, #tpu.memory_space<vmem>>, %arg2: memref<4x256xf32, #tpu.memory_space<vmem>>, %arg3: memref<64x8xf32, #tpu.memory_space<vmem>>, %arg4: memref<64x1xf32, #tpu.memory_space<vmem>>, %arg5: memref<16x64xf32, #tpu.memory_space<vmem>>, %arg6: memref<16x1xf32, #tpu.memory_space<vmem>>, %arg7: memref<1x16xf32, #tpu.memory_space<vmem>>, %arg8: memref<1x4xf32, #tpu.memory_space<vmem>>, %arg9: memref<1x1xf32, #tpu.memory_space<vmem>>, %arg10: memref<1x256xf32, #tpu.memory_space<vmem>>) attributes {dimension_semantics = [#tpu.dimension_semantics<parallel>], iteration_bounds = array<i64: 2>, scalar_prefetch = 0 : i64, scratch_operands = 0 : i64, tpu.core_type = #tpu.core_type<tc>, window_params = [{transform_indices = @transform_0, window_bounds = array<i64: 8, 256>}, {transform_indices = @transform_1, window_bounds = array<i64: 4, 256>}, {pipeline_mode = #tpu.pipeline_mode<synchronous>, transform_indices = @transform_2, window_bounds = array<i64: 64, 8>}, {pipeline_mode = #tpu.pipeline_mode<synchronous>, transform_indices = @transform_3, window_bounds = array<i64: 64, 1>}, {pipeline_mode = #tpu.pipeline_mode<synchronous>, transform_indices = @transform_4, window_bounds = array<i64: 16, 64>}, {pipeline_mode = #tpu.pipeline_mode<synchronous>, transform_indices = @transform_5, window_bounds = array<i64: 16, 1>}, {pipeline_mode = #tpu.pipeline_mode<synchronous>, transform_indices = @transform_6, window_bounds = array<i64: 1, 16>}, {pipeline_mode = #tpu.pipeline_mode<synchronous>, transform_indices = @transform_7, window_bounds = array<i64: 1, 4>}, {pipeline_mode = #tpu.pipeline_mode<synchronous>, transform_indices = @transform_8, window_bounds = array<i64: 1, 1>}, {transform_indices = @transform_9, window_bounds = array<i64: 1, 256>}]} {
    %c0 = arith.constant 0 : index
    %c0_0 = arith.constant 0 : index
    %0 = vector.load %arg3[%c0, %c0_0] : memref<64x8xf32, #tpu.memory_space<vmem>>, vector<64x8xf32>
    %c0_1 = arith.constant 0 : index
    %c0_2 = arith.constant 0 : index
    %1 = vector.load %arg1[%c0_1, %c0_2] : memref<8x256xf32, #tpu.memory_space<vmem>>, vector<8x256xf32>
    %cst = arith.constant dense<0.000000e+00> : vector<64x256xf32>
    %2 = tpu.matmul %0, %1, %cst {dimension_numbers = #tpu.dot_dimension_numbers<[1], [0], [0], [1], [0, 0, 1, 1], [], []>} : vector<64x8xf32>, vector<8x256xf32>, vector<64x256xf32> -> vector<64x256xf32>
    %c0_3 = arith.constant 0 : index
    %c0_4 = arith.constant 0 : index
    %3 = vector.load %arg4[%c0_3, %c0_4] : memref<64x1xf32, #tpu.memory_space<vmem>>, vector<64x1xf32>
    %4 = vector.broadcast %3 : vector<64x1xf32> to vector<64x256xf32>
    %5 = arith.addf %2, %4 : vector<64x256xf32>
    %cst_5 = arith.constant 0.000000e+00 : f32
    %6 = vector.broadcast %cst_5 : f32 to vector<64x256xf32>
    %7 = arith.maximumf %5, %6 : vector<64x256xf32>
    %c0_6 = arith.constant 0 : index
    %c0_7 = arith.constant 0 : index
    %8 = vector.load %arg5[%c0_6, %c0_7] : memref<16x64xf32, #tpu.memory_space<vmem>>, vector<16x64xf32>
    %cst_8 = arith.constant dense<0.000000e+00> : vector<16x256xf32>
    %9 = tpu.matmul %8, %7, %cst_8 {dimension_numbers = #tpu.dot_dimension_numbers<[1], [0], [0], [1], [0, 0, 1, 1], [], []>} : vector<16x64xf32>, vector<64x256xf32>, vector<16x256xf32> -> vector<16x256xf32>
    %c0_9 = arith.constant 0 : index
    %c0_10 = arith.constant 0 : index
    %10 = vector.load %arg6[%c0_9, %c0_10] : memref<16x1xf32, #tpu.memory_space<vmem>>, vector<16x1xf32>
    %11 = vector.broadcast %10 : vector<16x1xf32> to vector<16x256xf32>
    %12 = arith.addf %9, %11 : vector<16x256xf32>
    %cst_11 = arith.constant 0.000000e+00 : f32
    %13 = vector.broadcast %cst_11 : f32 to vector<16x256xf32>
    %14 = arith.maximumf %12, %13 : vector<16x256xf32>
    %c0_12 = arith.constant 0 : index
    %c0_13 = arith.constant 0 : index
    %15 = vector.load %arg2[%c0_12, %c0_13] : memref<4x256xf32, #tpu.memory_space<vmem>>, vector<4x256xf32>
    %cst_14 = arith.constant 0.000000e+00 : f32
    %16 = vector.broadcast %cst_14 : f32 to vector<4x256xf32>
    %17 = arith.maximumf %15, %16 : vector<4x256xf32>
    %c0_15 = arith.constant 0 : index
    %c0_16 = arith.constant 0 : index
    %18 = vector.load %arg7[%c0_15, %c0_16] : memref<1x16xf32, #tpu.memory_space<vmem>>, vector<1x16xf32>
    %cst_17 = arith.constant dense<0.000000e+00> : vector<1x256xf32>
    %19 = tpu.matmul %18, %14, %cst_17 {dimension_numbers = #tpu.dot_dimension_numbers<[1], [0], [0], [1], [0, 0, 1, 1], [], []>} : vector<1x16xf32>, vector<16x256xf32>, vector<1x256xf32> -> vector<1x256xf32>
    %c0_18 = arith.constant 0 : index
    %c0_19 = arith.constant 0 : index
    %20 = vector.load %arg8[%c0_18, %c0_19] : memref<1x4xf32, #tpu.memory_space<vmem>>, vector<1x4xf32>
    %cst_20 = arith.constant dense<0.000000e+00> : vector<1x256xf32>
    %21 = tpu.matmul %20, %17, %cst_20 {dimension_numbers = #tpu.dot_dimension_numbers<[1], [0], [0], [1], [0, 0, 1, 1], [], []>} : vector<1x4xf32>, vector<4x256xf32>, vector<1x256xf32> -> vector<1x256xf32>
    %22 = arith.addf %19, %21 : vector<1x256xf32>
    %c0_21 = arith.constant 0 : index
    %c0_22 = arith.constant 0 : index
    %23 = vector.load %arg9[%c0_21, %c0_22] : memref<1x1xf32, #tpu.memory_space<vmem>>, vector<1x1xf32>
    %24 = vector.broadcast %23 : vector<1x1xf32> to vector<1x256xf32>
    %25 = arith.addf %22, %24 : vector<1x256xf32>
    %c0_23 = arith.constant 0 : index
    %c0_24 = arith.constant 0 : index
    %26 = vector.load %arg10[%c0_23, %c0_24] : memref<1x256xf32, #tpu.memory_space<vmem>>, vector<1x256xf32>
    tpu.vector_store %arg10[%c0_23, %c0_24], %25 {strides = array<i32>} : memref<1x256xf32, #tpu.memory_space<vmem>>, vector<1x256xf32>,
    return
  }
  func.func @transform_0(%arg0: i32) -> (i32, i32) {
    %c0_i32 = arith.constant 0 : i32
    %c0_i32_0 = arith.constant 0 : i32
    return %c0_i32, %arg0 : i32, i32
  }
  func.func @transform_1(%arg0: i32) -> (i32, i32) {
    %c0_i32 = arith.constant 0 : i32
    %c0_i32_0 = arith.constant 0 : i32
    return %c0_i32, %arg0 : i32, i32
  }
  func.func @transform_2(%arg0: i32) -> (i32, i32) {
    %c0_i32 = arith.constant 0 : i32
    %c0_i32_0 = arith.constant 0 : i32
    %c0_i32_1 = arith.constant 0 : i32
    return %c0_i32, %c0_i32_0 : i32, i32
  }
  func.func @transform_3(%arg0: i32) -> (i32, i32) {
    %c0_i32 = arith.constant 0 : i32
    %c0_i32_0 = arith.constant 0 : i32
    %c0_i32_1 = arith.constant 0 : i32
    return %c0_i32, %c0_i32_0 : i32, i32
  }
  func.func @transform_4(%arg0: i32) -> (i32, i32) {
    %c0_i32 = arith.constant 0 : i32
    %c0_i32_0 = arith.constant 0 : i32
    %c0_i32_1 = arith.constant 0 : i32
    return %c0_i32, %c0_i32_0 : i32, i32
  }
  func.func @transform_5(%arg0: i32) -> (i32, i32) {
    %c0_i32 = arith.constant 0 : i32
    %c0_i32_0 = arith.constant 0 : i32
    %c0_i32_1 = arith.constant 0 : i32
    return %c0_i32, %c0_i32_0 : i32, i32
  }
  func.func @transform_6(%arg0: i32) -> (i32, i32) {
    %c0_i32 = arith.constant 0 : i32
    %c0_i32_0 = arith.constant 0 : i32
    %c0_i32_1 = arith.constant 0 : i32
    return %c0_i32, %c0_i32_0 : i32, i32
  }
  func.func @transform_7(%arg0: i32) -> (i32, i32) {
    %c0_i32 = arith.constant 0 : i32
    %c0_i32_0 = arith.constant 0 : i32
    %c0_i32_1 = arith.constant 0 : i32
    return %c0_i32, %c0_i32_0 : i32, i32
  }
  func.func @transform_8(%arg0: i32) -> (i32, i32) {
    %c0_i32 = arith.constant 0 : i32
    %c0_i32_0 = arith.constant 0 : i32
    %c0_i32_1 = arith.constant 0 : i32
    return %c0_i32, %c0_i32_0 : i32, i32
  }
  func.func @transform_9(%arg0: i32) -> (i32, i32) {
    %c0_i32 = arith.constant 0 : i32
    %c0_i32_0 = arith.constant 0 : i32
    return %c0_i32, %arg0 : i32, i32
  }
}

</mosaic_0001>

<llo_original>
// kernel: tpu_custom_call.1
$region0: #{tpu_custom_call.1}
  #allocation0 [shape = 'u32[]', space=smem, size = 0x4, offset = 0x4, fixed_abs, tag = 'smem constant byte address 0x4 - core index']
  #allocation1 [shape = 'u32[144,128]{1,0:T(1,128)}', space=vmem, size = 0x12000, scoped, tag = 'internal scratch']
  #allocation2 [shape = 'f32[1,1]{1,0:T(1,128)S(1)}', space=vmem, size = 0x200, scoped, tag = 'scoped memory for tpu_custom_call.1']
  %s0 = inlined_call_operand.vmem [shape: f32[8,512], index: 0, kind: input, shape index: {}]
  %s1 = inlined_call_operand.vmem [shape: f32[4,512], index: 1, kind: input, shape index: {}]
  %s2 = inlined_call_operand.vmem [shape: f32[64,8], index: 2, kind: input, shape index: {}]
  %s3 = inlined_call_operand.vmem [shape: f32[64,1], index: 3, kind: input, shape index: {}]
  %s4 = inlined_call_operand.vmem [shape: f32[16,64], index: 4, kind: input, shape index: {}]
  %s5 = inlined_call_operand.vmem [shape: f32[16,1], index: 5, kind: input, shape index: {}]
  %s6 = inlined_call_operand.vmem [shape: f32[1,16], index: 6, kind: input, shape index: {}]
  %s7 = inlined_call_operand.vmem [shape: f32[1,4], index: 7, kind: input, shape index: {}]
  %s8 = inlined_call_operand.<no memory space> [shape: f32[1,1], index: 8, kind: input, shape index: {}]
  %s9 = inlined_call_operand.hbm [shape: f32[1,512], index: 9, kind: output, shape index: {}]
  %s10 = sld [smem:[#allocation0]]
  $region69: #{tpu_custom_call.1} parent=0
    _
  %s12 = ssub.s32 1, %s10
  %s13 = scalar_select 0, %s12, %s10
  %v14 = vstv %s8
  %15 = vst [vmem:[#allocation2] sm:$0x1] %v14
  $region1: #{tpu_custom_call.1} parent=0
    #allocation3 [shape = 'u8[2048]{0}', space=vmem, size = 0x800, scoped, tag = 'output window, operand 0']
    #allocation4 [shape = 's32[2]{0}', space=sflag, size = 0x8, scoped, tag = 'scoped memory for tpu_custom_call.1']
    %16 = vsyncpa [#allocation4], 0
    %s17 = scalar_lea.sflag [#allocation4], 1
    %18 = vsyncpa %s17, 0
    loop: start=0, step=1, limit=4
    $region2: #{tpu_custom_call.1} parent=1 // loop_pre_header
      _
    $region3: #{tpu_custom_call.1} parent=1 // loop_header
      %s20 = sphi 0, %s24
      %p21 = scmp.ge.s32.totalorder %s20, 4
      %s30 = sphi 0, %s32
      %s33 = sphi 0, %s30
      %s34 = sphi 0, %s33
      %s50 = sphi 0, %s34
      %s56 = sphi 0, %s58
      %s59 = sphi 0, %s56
      %s60 = sphi 0, %s59
      %s76 = sphi 0, %s60
      %s80 = sphi 0, %s80
      %s82 = sphi 0, %s80
      %s83 = sphi 0, %s82
      %s97 = sphi 0, %s83
      %s101 = sphi 0, %s101
      %s103 = sphi 0, %s101
      %s104 = sphi 0, %s103
      %s118 = sphi 0, %s104
      %s122 = sphi 0, %s122
      %s124 = sphi 0, %s122
      %s125 = sphi 0, %s124
      %s139 = sphi 0, %s125
      %s143 = sphi 0, %s143
      %s145 = sphi 0, %s143
      %s146 = sphi 0, %s145
      %s160 = sphi 0, %s146
      %s164 = sphi 0, %s164
      %s166 = sphi 0, %s164
      %s167 = sphi 0, %s166
      %s181 = sphi 0, %s167
      %s185 = sphi 0, %s185
      %s187 = sphi 0, %s185
      %s188 = sphi 0, %s187
      %s202 = sphi 0, %s188
      %s206 = sphi 0, %s206
      %s208 = sphi 0, %s206
      %s209 = sphi 0, %s208
      %s223 = sphi 0, %s209
      %s229 = sphi 0, %s231
      %s232 = sphi 0, %s229
      %s233 = sphi 0, %s232
      %s249 = sphi 0, %s233
    $region4: #{tpu_custom_call.1} parent=1 // loop_header_branch
      %23 = sbr.rel (%p21) target = $region8
    $region5: #{tpu_custom_call.1} parent=1 // loop_body
      %s25 = ssub.s32 %s20, 1
      %s26 = ssub.s32 %s20, 2
      %s27 = sadd.s32 %s20, 1
      %s28 = ssub.s32 %s20, %s27
      %p29 = scmp.eq.s32.totalorder %s28, 0
      %s31 = sadd.s32 %s30, 1
      %s32 = scalar_select %p29, %s30, %s31
      %p35 = pneg %p29
      %p36 = scmp.eq.s32.totalorder %s20, 1
      %p37 = por %p35, %p36
      %p38 = scmp.ne.s32.totalorder %s30, %s33
      %p39 = scmp.eq.s32.totalorder %s20, 0
      %p40 = por %p38, %p39
      %p41 = scmp.ne.s32.totalorder %s30, %s33
      %p42 = scmp.eq.s32.totalorder %s25, 1
      %p43 = por %p41, %p42
      %p44 = scmp.ne.s32.totalorder %s33, %s34
      %p45 = scmp.eq.s32.totalorder %s25, 0
      %p46 = por %p44, %p45
      %p47 = scmp.ne.s32.totalorder %s33, %s34
      %p48 = scmp.eq.s32.totalorder %s26, 1
      %p49 = por %p47, %p48
      %p51 = scmp.ne.s32.totalorder %s34, %s50
      %p52 = scmp.eq.s32.totalorder %s26, 0
      %p53 = por %p51, %p52
      %s54 = ssub.s32 %s20, %s27
      %p55 = scmp.eq.s32.totalorder %s54, 0
      %s57 = sadd.s32 %s56, 1
      %s58 = scalar_select %p55, %s56, %s57
      %p61 = pneg %p55
      %p62 = scmp.eq.s32.totalorder %s20, 1
      %p63 = por %p61, %p62
      %p64 = scmp.ne.s32.totalorder %s56, %s59
      %p65 = scmp.eq.s32.totalorder %s20, 0
      %p66 = por %p64, %p65
      %p67 = scmp.ne.s32.totalorder %s56, %s59
      %p68 = scmp.eq.s32.totalorder %s25, 1
      %p69 = por %p67, %p68
      %p70 = scmp.ne.s32.totalorder %s59, %s60
      %p71 = scmp.eq.s32.totalorder %s25, 0
      %p72 = por %p70, %p71
      %p73 = scmp.ne.s32.totalorder %s59, %s60
      %p74 = scmp.eq.s32.totalorder %s26, 1
      %p75 = por %p73, %p74
      %p77 = scmp.ne.s32.totalorder %s60, %s76
      %p78 = scmp.eq.s32.totalorder %s26, 0
      %p79 = por %p77, %p78
      %s81 = sadd.s32 %s80, 1
      %p84 = scmp.eq.s32.totalorder %s20, 1
      %p85 = scmp.ne.s32.totalorder %s80, %s82
      %p86 = scmp.eq.s32.totalorder %s20, 0
      %p87 = por %p85, %p86
      %p88 = scmp.ne.s32.totalorder %s80, %s82
      %p89 = scmp.eq.s32.totalorder %s25, 1
      %p90 = por %p88, %p89
      %p91 = scmp.ne.s32.totalorder %s82, %s83
      %p92 = scmp.eq.s32.totalorder %s25, 0
      %p93 = por %p91, %p92
      %p94 = scmp.ne.s32.totalorder %s82, %s83
      %p95 = scmp.eq.s32.totalorder %s26, 1
      %p96 = por %p94, %p95
      %p98 = scmp.ne.s32.totalorder %s83, %s97
      %p99 = scmp.eq.s32.totalorder %s26, 0
      %p100 = por %p98, %p99
      %s102 = sadd.s32 %s101, 1
      %p105 = scmp.eq.s32.totalorder %s20, 1
      %p106 = scmp.ne.s32.totalorder %s101, %s103
      %p107 = scmp.eq.s32.totalorder %s20, 0
      %p108 = por %p106, %p107
      %p109 = scmp.ne.s32.totalorder %s101, %s103
      %p110 = scmp.eq.s32.totalorder %s25, 1
      %p111 = por %p109, %p110
      %p112 = scmp.ne.s32.totalorder %s103, %s104
      %p113 = scmp.eq.s32.totalorder %s25, 0
      %p114 = por %p112, %p113
      %p115 = scmp.ne.s32.totalorder %s103, %s104
      %p116 = scmp.eq.s32.totalorder %s26, 1
      %p117 = por %p115, %p116
      %p119 = scmp.ne.s32.totalorder %s104, %s118
      %p120 = scmp.eq.s32.totalorder %s26, 0
      %p121 = por %p119, %p120
      %s123 = sadd.s32 %s122, 1
      %p126 = scmp.eq.s32.totalorder %s20, 1
      %p127 = scmp.ne.s32.totalorder %s122, %s124
      %p128 = scmp.eq.s32.totalorder %s20, 0
      %p129 = por %p127, %p128
      %p130 = scmp.ne.s32.totalorder %s122, %s124
      %p131 = scmp.eq.s32.totalorder %s25, 1
      %p132 = por %p130, %p131
      %p133 = scmp.ne.s32.totalorder %s124, %s125
      %p134 = scmp.eq.s32.totalorder %s25, 0
      %p135 = por %p133, %p134
      %p136 = scmp.ne.s32.totalorder %s124, %s125
      %p137 = scmp.eq.s32.totalorder %s26, 1
      %p138 = por %p136, %p137
      %p140 = scmp.ne.s32.totalorder %s125, %s139
      %p141 = scmp.eq.s32.totalorder %s26, 0
      %p142 = por %p140, %p141
      %s144 = sadd.s32 %s143, 1
      %p147 = scmp.eq.s32.totalorder %s20, 1
      %p148 = scmp.ne.s32.totalorder %s143, %s145
      %p149 = scmp.eq.s32.totalorder %s20, 0
      %p150 = por %p148, %p149
      %p151 = scmp.ne.s32.totalorder %s143, %s145
      %p152 = scmp.eq.s32.totalorder %s25, 1
      %p153 = por %p151, %p152
      %p154 = scmp.ne.s32.totalorder %s145, %s146
      %p155 = scmp.eq.s32.totalorder %s25, 0
      %p156 = por %p154, %p155
      %p157 = scmp.ne.s32.totalorder %s145, %s146
      %p158 = scmp.eq.s32.totalorder %s26, 1
      %p159 = por %p157, %p158
      %p161 = scmp.ne.s32.totalorder %s146, %s160
      %p162 = scmp.eq.s32.totalorder %s26, 0
      %p163 = por %p161, %p162
      %s165 = sadd.s32 %s164, 1
      %p168 = scmp.eq.s32.totalorder %s20, 1
      %p169 = scmp.ne.s32.totalorder %s164, %s166
      %p170 = scmp.eq.s32.totalorder %s20, 0
      %p171 = por %p169, %p170
      %p172 = scmp.ne.s32.totalorder %s164, %s166
      %p173 = scmp.eq.s32.totalorder %s25, 1
      %p174 = por %p172, %p173
      %p175 = scmp.ne.s32.totalorder %s166, %s167
      %p176 = scmp.eq.s32.totalorder %s25, 0
      %p177 = por %p175, %p176
      %p178 = scmp.ne.s32.totalorder %s166, %s167
      %p179 = scmp.eq.s32.totalorder %s26, 1
      %p180 = por %p178, %p179
      %p182 = scmp.ne.s32.totalorder %s167, %s181
      %p183 = scmp.eq.s32.totalorder %s26, 0
      %p184 = por %p182, %p183
      %s186 = sadd.s32 %s185, 1
      %p189 = scmp.eq.s32.totalorder %s20, 1
      %p190 = scmp.ne.s32.totalorder %s185, %s187
      %p191 = scmp.eq.s32.totalorder %s20, 0
      %p192 = por %p190, %p191
      %p193 = scmp.ne.s32.totalorder %s185, %s187
      %p194 = scmp.eq.s32.totalorder %s25, 1
      %p195 = por %p193, %p194
      %p196 = scmp.ne.s32.totalorder %s187, %s188
      %p197 = scmp.eq.s32.totalorder %s25, 0
      %p198 = por %p196, %p197
      %p199 = scmp.ne.s32.totalorder %s187, %s188
      %p200 = scmp.eq.s32.totalorder %s26, 1
      %p201 = por %p199, %p200
      %p203 = scmp.ne.s32.totalorder %s188, %s202
      %p204 = scmp.eq.s32.totalorder %s26, 0
      %p205 = por %p203, %p204
      %s207 = sadd.s32 %s206, 1
      %p210 = scmp.eq.s32.totalorder %s20, 1
      %p211 = scmp.ne.s32.totalorder %s206, %s208
      %p212 = scmp.eq.s32.totalorder %s20, 0
      %p213 = por %p211, %p212
      %p214 = scmp.ne.s32.totalorder %s206, %s208
      %p215 = scmp.eq.s32.totalorder %s25, 1
      %p216 = por %p214, %p215
      %p217 = scmp.ne.s32.totalorder %s208, %s209
      %p218 = scmp.eq.s32.totalorder %s25, 0
      %p219 = por %p217, %p218
      %p220 = scmp.ne.s32.totalorder %s208, %s209
      %p221 = scmp.eq.s32.totalorder %s26, 1
      %p222 = por %p220, %p221
      %p224 = scmp.ne.s32.totalorder %s209, %s223
      %p225 = scmp.eq.s32.totalorder %s26, 0
      %p226 = por %p224, %p225
      %s227 = ssub.s32 %s20, %s27
      %p228 = scmp.eq.s32.totalorder %s227, 0
      %s230 = sadd.s32 %s229, 1
      %s231 = scalar_select %p228, %s229, %s230
      %p234 = pneg %p228
      %p235 = scmp.eq.s32.totalorder %s20, 1
      %p236 = por %p234, %p235
      %p237 = scmp.ne.s32.totalorder %s229, %s232
      %p238 = scmp.eq.s32.totalorder %s20, 0
      %p239 = por %p237, %p238
      %p240 = scmp.ne.s32.totalorder %s229, %s232
      %p241 = scmp.eq.s32.totalorder %s25, 1
      %p242 = por %p240, %p241
      %p243 = scmp.ne.s32.totalorder %s232, %s233
      %p244 = scmp.eq.s32.totalorder %s25, 0
      %p245 = por %p243, %p244
      %p246 = scmp.ne.s32.totalorder %s232, %s233
      %p247 = scmp.eq.s32.totalorder %s26, 1
      %p248 = por %p246, %p247
      %p250 = scmp.ne.s32.totalorder %s233, %s249
      %p251 = scmp.eq.s32.totalorder %s26, 0
      %p252 = por %p250, %p251
      %p253 = scmp.le.s32.totalorder 1, %s20
      %p254 = scmp.lt.s32.totalorder %s20, 3
      %p255 = pnand %p253, %p254
      %p256 = pneg %p255
      // Predicated region
      $region9: #{tpu_custom_call.1} parent=5 // pred_check
        _
      $region10: #{tpu_custom_call.1} parent=5 // pred_check_branch
        %258 = sbr.rel (%p255) target = $region12
      $region11: #{tpu_custom_call.1} parent=5 // pred_region
        %s259 = ssub.s32 %s20, 1
        // Predicated region
        $region13: #{tpu_custom_call.1} parent=11 // pred_check
          %p260 = pneg %p93
        $region14: #{tpu_custom_call.1} parent=11 // pred_check_branch
          %262 = sbr.rel (%p260) target = $region16
        $region15: #{tpu_custom_call.1} parent=11 // pred_region
          _
        $region16: #{tpu_custom_call.1} parent=11 // pred_fallthru
          _
        // Predicated region
        $region17: #{tpu_custom_call.1} parent=11 // pred_check
          %p263 = pneg %p114
        $region18: #{tpu_custom_call.1} parent=11 // pred_check_branch
          %265 = sbr.rel (%p263) target = $region20
        $region19: #{tpu_custom_call.1} parent=11 // pred_region
          _
        $region20: #{tpu_custom_call.1} parent=11 // pred_fallthru
          _
        // Predicated region
        $region21: #{tpu_custom_call.1} parent=11 // pred_check
          %p266 = pneg %p135
        $region22: #{tpu_custom_call.1} parent=11 // pred_check_branch
          %268 = sbr.rel (%p266) target = $region24
        $region23: #{tpu_custom_call.1} parent=11 // pred_region
          _
        $region24: #{tpu_custom_call.1} parent=11 // pred_fallthru
          _
        // Predicated region
        $region25: #{tpu_custom_call.1} parent=11 // pred_check
          %p269 = pneg %p156
        $region26: #{tpu_custom_call.1} parent=11 // pred_check_branch
          %271 = sbr.rel (%p269) target = $region28
        $region27: #{tpu_custom_call.1} parent=11 // pred_region
          _
        $region28: #{tpu_custom_call.1} parent=11 // pred_fallthru
          _
        // Predicated region
        $region29: #{tpu_custom_call.1} parent=11 // pred_check
          %p272 = pneg %p177
        $region30: #{tpu_custom_call.1} parent=11 // pred_check_branch
          %274 = sbr.rel (%p272) target = $region32
        $region31: #{tpu_custom_call.1} parent=11 // pred_region
          _
        $region32: #{tpu_custom_call.1} parent=11 // pred_fallthru
          _
        // Predicated region
        $region33: #{tpu_custom_call.1} parent=11 // pred_check
          %p275 = pneg %p198
        $region34: #{tpu_custom_call.1} parent=11 // pred_check_branch
          %277 = sbr.rel (%p275) target = $region36
        $region35: #{tpu_custom_call.1} parent=11 // pred_region
          _
        $region36: #{tpu_custom_call.1} parent=11 // pred_fallthru
          _
        // Predicated region
        $region37: #{tpu_custom_call.1} parent=11 // pred_check
          %p278 = pneg %p219
        $region38: #{tpu_custom_call.1} parent=11 // pred_check_branch
          %280 = sbr.rel (%p278) target = $region40
        $region39: #{tpu_custom_call.1} parent=11 // pred_region
          _
        $region40: #{tpu_custom_call.1} parent=11 // pred_fallthru
          _
      $region12: #{tpu_custom_call.1} parent=5 // pred_fallthru
        _
      %p281 = scmp.lt.s32.totalorder %s20, 2
      // Predicated region
      $region41: #{tpu_custom_call.1} parent=5 // pred_check
        %p282 = pneg %p281
      $region42: #{tpu_custom_call.1} parent=5 // pred_check_branch
        %284 = sbr.rel (%p282) target = $region44
      $region43: #{tpu_custom_call.1} parent=5 // pred_region
        // Predicated region
        $region45: #{tpu_custom_call.1} parent=43 // pred_check
          %p285 = pneg %p40
        $region46: #{tpu_custom_call.1} parent=43 // pred_check_branch
          %287 = sbr.rel (%p285) target = $region48
        $region47: #{tpu_custom_call.1} parent=43 // pred_region
          %s288 = smul.u32 2, %s20
          %p289 = scmp.lt.s32.totalorder %s288, 3
          %s290 = scalar_select %p289, %s288, 3
          %s291 = smul.addr %s290, 8
          %s292 = scalar_lea.vmem %s0, %s291
          %s293 = smul.u32 2, %s20
        $region48: #{tpu_custom_call.1} parent=43 // pred_fallthru
          _
        // Predicated region
        $region49: #{tpu_custom_call.1} parent=43 // pred_check
          %p294 = pneg %p66
        $region50: #{tpu_custom_call.1} parent=43 // pred_check_branch
          %296 = sbr.rel (%p294) target = $region52
        $region51: #{tpu_custom_call.1} parent=43 // pred_region
          %s297 = smul.u32 2, %s20
          %p298 = scmp.lt.s32.totalorder %s297, 3
          %s299 = scalar_select %p298, %s297, 3
          %s300 = smul.addr %s299, 4
          %s301 = scalar_lea.vmem %s1, %s300
          %s302 = smul.u32 2, %s20
        $region52: #{tpu_custom_call.1} parent=43 // pred_fallthru
          _
      $region44: #{tpu_custom_call.1} parent=5 // pred_fallthru
        _
      %p303 = scmp.le.s32.totalorder 1, %s20
      %p304 = scmp.lt.s32.totalorder %s20, 3
      %p305 = pnand %p303, %p304
      %p306 = pneg %p305
      // Predicated region
      $region53: #{tpu_custom_call.1} parent=5 // pred_check
        _
      $region54: #{tpu_custom_call.1} parent=5 // pred_check_branch
        %308 = sbr.rel (%p305) target = $region56
      $region55: #{tpu_custom_call.1} parent=5 // pred_region
        %s309 = ssub.s32 %s20, 1
        %s310 = smul.u32 2, %s25
        %p311 = scmp.lt.s32.totalorder %s310, 3
        %s312 = scalar_select %p311, %s310, 3
        %s313 = smul.addr %s312, 8
        %s314 = scalar_lea.vmem %s0, %s313
        %p315 = pneg %p46
        %p316 = pneg %p43
        %s317 = smul.u32 2, %s25
        %p318 = scmp.lt.s32.totalorder %s317, 3
        %s319 = scalar_select %p318, %s317, 3
        %s320 = smul.addr %s319, 4
        %s321 = scalar_lea.vmem %s1, %s320
        %p322 = pneg %p72
        %p323 = pneg %p69
        %p324 = pneg %p93
        %p325 = pneg %p90
        %p326 = pneg %p114
        %p327 = pneg %p111
        %p328 = pneg %p135
        %p329 = pneg %p132
        %p330 = pneg %p156
        %p331 = pneg %p153
        %p332 = pneg %p177
        %p333 = pneg %p174
        %p334 = pneg %p198
        %p335 = pneg %p195
        %p336 = pneg %p219
        %p337 = pneg %p216
        %p338 = pneg %p245
        %p339 = pneg %p242
        %s340 = sand.u32 %s232, 1
        %s341 = scalar_lea.sflag [#allocation4], %s340
        %s342 = sand.u32 %s232, 1
        %s343 = smul.addr %s342, 2
        %s344 = scalar_lea.vmem [#allocation3], %s343
        %s345 = smul.u32 2, %s25
        %p346 = scmp.lt.s32.totalorder %s345, 3
        %s347 = scalar_select %p346, %s345, 3
        %s348 = smul.addr %s347, 8
        %s349 = scalar_lea.vmem %s0, %s348
        %s350 = smul.u32 2, %s25
        %s351 = smul.u32 2, %s25
        %p352 = scmp.lt.s32.totalorder %s351, 3
        %s353 = scalar_select %p352, %s351, 3
        %s354 = smul.addr %s353, 4
        %s355 = scalar_lea.vmem %s1, %s354
        %s356 = smul.u32 2, %s25
        %s357 = smul.u32 2, %s25
        %v358 = vld [vmem:[%s2] sm:$0xff]
        %v359 = vld [vmem:[%s2 + $0x8] sm:$0xff]
        %v360 = vld [vmem:[%s2 + $0x10] sm:$0xff]
        %v361 = vld [vmem:[%s2 + $0x18] sm:$0xff]
        %v362 = vld [vmem:[%s2 + $0x20] sm:$0xff]
        %v363 = vld [vmem:[%s2 + $0x28] sm:$0xff]
        %v364 = vld [vmem:[%s2 + $0x30] sm:$0xff]
        %v365 = vld [vmem:[%s2 + $0x38] sm:$0xff]
        %v366 = vld [vmem:[%s349] sm:$0xff]
        %v367 = vld [vmem:[%s349 + $0x8] sm:$0xff]
        %v368 = vld [vmem:[%s3] sm:$0xff]
        %v369 = vld [vmem:[%s3 + $0x8] sm:$0xff]
        %v370 = vld [vmem:[%s3 + $0x10] sm:$0xff]
        %v371 = vld [vmem:[%s3 + $0x18] sm:$0xff]
        %v372 = vld [vmem:[%s3 + $0x20] sm:$0xff]
        %v373 = vld [vmem:[%s3 + $0x28] sm:$0xff]
        %v374 = vld [vmem:[%s3 + $0x30] sm:$0xff]
        %v375 = vld [vmem:[%s3 + $0x38] sm:$0xff]
        %377 = vset.pattern.permute.xlu0 0
        %378 = vperm.xlu0 %377, %v368
        %v379 = vpop.permute.xlu0 %378
        %382 = vset.pattern.permute.xlu0 0
        %383 = vperm.xlu0 %382, %v369
        %v384 = vpop.permute.xlu0 %383
        %387 = vset.pattern.permute.xlu0 0
        %388 = vperm.xlu0 %387, %v370
        %v389 = vpop.permute.xlu0 %388
        %392 = vset.pattern.permute.xlu0 0
        %393 = vperm.xlu0 %392, %v371
        %v394 = vpop.permute.xlu0 %393
        %397 = vset.pattern.permute.xlu0 0
        %398 = vperm.xlu0 %397, %v372
        %v399 = vpop.permute.xlu0 %398
        %402 = vset.pattern.permute.xlu0 0
        %403 = vperm.xlu0 %402, %v373
        %v404 = vpop.permute.xlu0 %403
        %407 = vset.pattern.permute.xlu0 0
        %408 = vperm.xlu0 %407, %v374
        %v409 = vpop.permute.xlu0 %408
        %412 = vset.pattern.permute.xlu0 0
        %413 = vperm.xlu0 %412, %v375
        %v414 = vpop.permute.xlu0 %413
        %vm416 = vcmask 64512
        %v418 = vsel %vm416, %v358, 0
        %v421 = vsel %vm416, %v359, 0
        %v424 = vsel %vm416, %v360, 0
        %v427 = vsel %vm416, %v361, 0
        %v430 = vsel %vm416, %v362, 0
        %v433 = vsel %vm416, %v363, 0
        %v436 = vsel %vm416, %v364, 0
        %v439 = vsel %vm416, %v365, 0
        %441 = vmatprep.subr.mxu0 0.0
        %442 = vmatpush1.msra.mxu0 0.0
        %443 = vmatprep.subr.mxu0 0.0
        %444 = vmatpush1.msra.mxu0 0.0
        %445 = vmatprep.subr.mxu0 0.0
        %446 = vmatpush1.msra.mxu0 0.0
        %447 = vmatprep.subr.mxu0 0.0
        %448 = vmatpush1.msra.mxu0 0.0
        %449 = vmatprep.subr.mxu0 0.0
        %450 = vmatpush1.msra.mxu0 0.0
        %451 = vmatprep.subr.mxu0 0.0
        %452 = vmatpush1.msra.mxu0 0.0
        %453 = vmatprep.subr.mxu0 0.0
        %454 = vmatpush1.msra.mxu0 0.0
        %455 = vmatprep.subr.mxu0 0.0
        %456 = vmatpush1.msra.mxu0 0.0
        %457 = vmatprep.subr.mxu0 0.0
        %458 = vmatpush1.msra.mxu0 0.0
        %459 = vmatprep.subr.mxu0 0.0
        %460 = vmatpush1.msra.mxu0 0.0
        %461 = vmatprep.subr.mxu0 0.0
        %462 = vmatpush1.msra.mxu0 0.0
        %463 = vmatprep.subr.mxu0 0.0
        %464 = vmatpush1.msra.mxu0 0.0
        %465 = vmatprep.subr.mxu0 0.0
        %466 = vmatpush1.msra.mxu0 0.0
        %467 = vmatprep.subr.mxu0 0.0
        %468 = vmatpush1.msra.mxu0 0.0
        %469 = vmatprep.subr.mxu0 0.0
        %470 = vmatpush1.msra.mxu0 0.0
        %471 = vmatprep.subr.mxu0 %v367
        %472 = vmatpush1.msra.mxu0 %v366
        %473 = vmatprep.subr.mxu0 0.0
        %474 = vmatpush2.msra.mxu0 0.0
        %475 = vmatprep.subr.mxu0 0.0
        %476 = vmatpush2.msra.mxu0 0.0
        %477 = vmatprep.subr.mxu0 0.0
        %478 = vmatpush2.msra.mxu0 0.0
        %479 = vmatprep.subr.mxu0 0.0
        %480 = vmatpush2.msra.mxu0 0.0
        %481 = vmatprep.subr.mxu0 0.0
        %482 = vmatpush2.msra.mxu0 0.0
        %483 = vmatprep.subr.mxu0 0.0
        %484 = vmatpush2.msra.mxu0 0.0
        %485 = vmatprep.subr.mxu0 0.0
        %486 = vmatpush2.msra.mxu0 0.0
        %487 = vmatprep.subr.mxu0 0.0
        %488 = vmatpush2.msra.mxu0 0.0
        %489 = vmatprep.subr.mxu0 0.0
        %490 = vmatpush2.msra.mxu0 0.0
        %491 = vmatprep.subr.mxu0 0.0
        %492 = vmatpush2.msra.mxu0 0.0
        %493 = vmatprep.subr.mxu0 0.0
        %494 = vmatpush2.msra.mxu0 0.0
        %495 = vmatprep.subr.mxu0 0.0
        %496 = vmatpush2.msra.mxu0 0.0
        %497 = vmatprep.subr.mxu0 0.0
        %498 = vmatpush2.msra.mxu0 0.0
        %499 = vmatprep.subr.mxu0 0.0
        %500 = vmatpush2.msra.mxu0 0.0
        %501 = vmatprep.subr.mxu0 0.0
        %502 = vmatpush2.msra.mxu0 0.0
        %503 = vmatprep.subr.mxu0 0.0
        %504 = vmatpush2.msra.mxu0 0.0
        %505 = vmatprep.mubr.f32.mxu0 0.0
        %506 = vmatmul.mubr.f32.gmra.mxu0 %v418
        %v507 = vpop.f32.mrf.mxu0
        %v508 = vadd.f32 %v379, %v507
        %v509 = vpop.f32.mrf.mxu0
        %v510 = vadd.f32 %v379, %v509
        %511 = vmatprep.mubr.f32.mxu0 0.0
        %512 = vmatmul.mubr.f32.gmra.mxu0 %v421
        %v513 = vpop.f32.mrf.mxu0
        %v514 = vadd.f32 %v384, %v513
        %v515 = vpop.f32.mrf.mxu0
        %v516 = vadd.f32 %v384, %v515
        %517 = vmatprep.mubr.f32.mxu0 0.0
        %518 = vmatmul.mubr.f32.gmra.mxu0 %v424
        %v519 = vpop.f32.mrf.mxu0
        %v520 = vadd.f32 %v389, %v519
        %v521 = vpop.f32.mrf.mxu0
        %v522 = vadd.f32 %v389, %v521
        %523 = vmatprep.mubr.f32.mxu0 0.0
        %524 = vmatmul.mubr.f32.gmra.mxu0 %v427
        %v525 = vpop.f32.mrf.mxu0
        %v526 = vadd.f32 %v394, %v525
        %v527 = vpop.f32.mrf.mxu0
        %v528 = vadd.f32 %v394, %v527
        %529 = vmatprep.mubr.f32.mxu0 0.0
        %530 = vmatmul.mubr.f32.gmra.mxu0 %v430
        %v531 = vpop.f32.mrf.mxu0
        %v532 = vadd.f32 %v399, %v531
        %v533 = vpop.f32.mrf.mxu0
        %v534 = vadd.f32 %v399, %v533
        %535 = vmatprep.mubr.f32.mxu0 0.0
        %536 = vmatmul.mubr.f32.gmra.mxu0 %v433
        %v537 = vpop.f32.mrf.mxu0
        %v538 = vadd.f32 %v404, %v537
        %v539 = vpop.f32.mrf.mxu0
        %v540 = vadd.f32 %v404, %v539
        %541 = vmatprep.mubr.f32.mxu0 0.0
        %542 = vmatmul.mubr.f32.gmra.mxu0 %v436
        %v543 = vpop.f32.mrf.mxu0
        %v544 = vadd.f32 %v409, %v543
        %v545 = vpop.f32.mrf.mxu0
        %v546 = vadd.f32 %v409, %v545
        %547 = vmatprep.mubr.f32.mxu0 0.0
        %548 = vmatmul.mubr.f32.gmra.mxu0 %v439
        %v549 = vpop.f32.mrf.mxu0
        %v550 = vadd.f32 %v414, %v549
        %v551 = vpop.f32.mrf.mxu0
        %v552 = vadd.f32 %v414, %v551
        %553 = vdwg.mxu0
        %v554 = vmax.f32 %v508, 0.0
        %v555 = vmax.f32 %v510, 0.0
        %v556 = vmax.f32 %v514, 0.0
        %v557 = vmax.f32 %v516, 0.0
        %v558 = vmax.f32 %v520, 0.0
        %v559 = vmax.f32 %v522, 0.0
        %v560 = vmax.f32 %v526, 0.0
        %v561 = vmax.f32 %v528, 0.0
        %v562 = vmax.f32 %v532, 0.0
        %v563 = vmax.f32 %v534, 0.0
        %v564 = vmax.f32 %v538, 0.0
        %v565 = vmax.f32 %v540, 0.0
        %v566 = vmax.f32 %v544, 0.0
        %v567 = vmax.f32 %v546, 0.0
        %v568 = vmax.f32 %v550, 0.0
        %v569 = vmax.f32 %v552, 0.0
        %v570 = vld [vmem:[%s4] sm:$0xff]
        %v571 = vld [vmem:[%s4 + $0x8] sm:$0xff]
        %v572 = vld [vmem:[%s5] sm:$0xff]
        %v573 = vld [vmem:[%s5 + $0x8] sm:$0xff]
        %575 = vset.pattern.permute.xlu0 0
        %576 = vperm.xlu0 %575, %v572
        %v577 = vpop.permute.xlu0 %576
        %580 = vset.pattern.permute.xlu0 0
        %581 = vperm.xlu0 %580, %v573
        %v582 = vpop.permute.xlu0 %581
        %vm584 = vcmask 523264
        %v586 = vsel %vm584, %v570, 0
        %v589 = vsel %vm584, %v571, 0
        %591 = vmatprep.subr.mxu0 0.0
        %592 = vmatpush1.msra.mxu0 0.0
        %593 = vmatprep.subr.mxu0 0.0
        %594 = vmatpush1.msra.mxu0 0.0
        %595 = vmatprep.subr.mxu0 0.0
        %596 = vmatpush1.msra.mxu0 0.0
        %597 = vmatprep.subr.mxu0 0.0
        %598 = vmatpush1.msra.mxu0 0.0
        %599 = vmatprep.subr.mxu0 0.0
        %600 = vmatpush1.msra.mxu0 0.0
        %601 = vmatprep.subr.mxu0 0.0
        %602 = vmatpush1.msra.mxu0 0.0
        %603 = vmatprep.subr.mxu0 0.0
        %604 = vmatpush1.msra.mxu0 0.0
        %605 = vmatprep.subr.mxu0 0.0
        %606 = vmatpush1.msra.mxu0 0.0
        %607 = vmatprep.subr.mxu0 %v569
        %608 = vmatpush1.msra.mxu0 %v568
        %609 = vmatprep.subr.mxu0 %v567
        %610 = vmatpush1.msra.mxu0 %v566
        %611 = vmatprep.subr.mxu0 %v565
        %612 = vmatpush1.msra.mxu0 %v564
        %613 = vmatprep.subr.mxu0 %v563
        %614 = vmatpush1.msra.mxu0 %v562
        %615 = vmatprep.subr.mxu0 %v561
        %616 = vmatpush1.msra.mxu0 %v560
        %617 = vmatprep.subr.mxu0 %v559
        %618 = vmatpush1.msra.mxu0 %v558
        %619 = vmatprep.subr.mxu0 %v557
        %620 = vmatpush1.msra.mxu0 %v556
        %621 = vmatprep.subr.mxu0 %v555
        %622 = vmatpush1.msra.mxu0 %v554
        %623 = vmatprep.subr.mxu0 0.0
        %624 = vmatpush2.msra.mxu0 0.0
        %625 = vmatprep.subr.mxu0 0.0
        %626 = vmatpush2.msra.mxu0 0.0
        %627 = vmatprep.subr.mxu0 0.0
        %628 = vmatpush2.msra.mxu0 0.0
        %629 = vmatprep.subr.mxu0 0.0
        %630 = vmatpush2.msra.mxu0 0.0
        %631 = vmatprep.subr.mxu0 0.0
        %632 = vmatpush2.msra.mxu0 0.0
        %633 = vmatprep.subr.mxu0 0.0
        %634 = vmatpush2.msra.mxu0 0.0
        %635 = vmatprep.subr.mxu0 0.0
        %636 = vmatpush2.msra.mxu0 0.0
        %637 = vmatprep.subr.mxu0 0.0
        %638 = vmatpush2.msra.mxu0 0.0
        %639 = vmatprep.subr.mxu0 0.0
        %640 = vmatpush2.msra.mxu0 0.0
        %641 = vmatprep.subr.mxu0 0.0
        %642 = vmatpush2.msra.mxu0 0.0
        %643 = vmatprep.subr.mxu0 0.0
        %644 = vmatpush2.msra.mxu0 0.0
        %645 = vmatprep.subr.mxu0 0.0
        %646 = vmatpush2.msra.mxu0 0.0
        %647 = vmatprep.subr.mxu0 0.0
        %648 = vmatpush2.msra.mxu0 0.0
        %649 = vmatprep.subr.mxu0 0.0
        %650 = vmatpush2.msra.mxu0 0.0
        %651 = vmatprep.subr.mxu0 0.0
        %652 = vmatpush2.msra.mxu0 0.0
        %653 = vmatprep.subr.mxu0 0.0
        %654 = vmatpush2.msra.mxu0 0.0
        %655 = vmatprep.mubr.f32.mxu0 0.0
        %656 = vmatmul.mubr.f32.gmra.mxu0 %v586
        %v657 = vpop.f32.mrf.mxu0
        %v658 = vadd.f32 %v577, %v657
        %v659 = vpop.f32.mrf.mxu0
        %v660 = vadd.f32 %v577, %v659
        %661 = vmatprep.mubr.f32.mxu0 0.0
        %662 = vmatmul.mubr.f32.gmra.mxu0 %v589
        %v663 = vpop.f32.mrf.mxu0
        %v664 = vadd.f32 %v582, %v663
        %v665 = vpop.f32.mrf.mxu0
        %v666 = vadd.f32 %v582, %v665
        %667 = vdwg.mxu0
        %v668 = vmax.f32 %v658, 0.0
        %v669 = vmax.f32 %v660, 0.0
        %v670 = vmax.f32 %v664, 0.0
        %v671 = vmax.f32 %v666, 0.0
        %v672 = vld [vmem:[%s355] sm:$0xff]
        %v673 = vmax.f32 %v672, 0.0
        %v674 = vld [vmem:[%s6] sm:$0x1]
        %v675 = vld [vmem:[%s7] sm:$0x1]
        %v677 = vcombine.high %v673, %v673
        %vm678 = vcmask 31744
        %v680 = vsel %vm678, %v675, 0
        %vm682 = vcmask 1043456
        %v683 = vsel %vm682, %v673, 0
        %v685 = vsel %vm682, %v677, 0
        %687 = vmatprep.subr.mxu0 0.0
        %688 = vmatpush1.msra.mxu0 0.0
        %689 = vmatprep.subr.mxu0 0.0
        %690 = vmatpush1.msra.mxu0 0.0
        %691 = vmatprep.subr.mxu0 0.0
        %692 = vmatpush1.msra.mxu0 0.0
        %693 = vmatprep.subr.mxu0 0.0
        %694 = vmatpush1.msra.mxu0 0.0
        %695 = vmatprep.subr.mxu0 0.0
        %696 = vmatpush1.msra.mxu0 0.0
        %697 = vmatprep.subr.mxu0 0.0
        %698 = vmatpush1.msra.mxu0 0.0
        %699 = vmatprep.subr.mxu0 0.0
        %700 = vmatpush1.msra.mxu0 0.0
        %701 = vmatprep.subr.mxu0 0.0
        %702 = vmatpush1.msra.mxu0 0.0
        %703 = vmatprep.subr.mxu0 0.0
        %704 = vmatpush1.msra.mxu0 0.0
        %705 = vmatprep.subr.mxu0 0.0
        %706 = vmatpush1.msra.mxu0 0.0
        %707 = vmatprep.subr.mxu0 0.0
        %708 = vmatpush1.msra.mxu0 0.0
        %709 = vmatprep.subr.mxu0 0.0
        %710 = vmatpush1.msra.mxu0 0.0
        %711 = vmatprep.subr.mxu0 0.0
        %712 = vmatpush1.msra.mxu0 0.0
        %713 = vmatprep.subr.mxu0 0.0
        %714 = vmatpush1.msra.mxu0 0.0
        %715 = vmatprep.subr.mxu0 0.0
        %716 = vmatpush1.msra.mxu0 0.0
        %717 = vmatprep.subr.mxu0 %v685
        %718 = vmatpush1.msra.mxu0 %v683
        %719 = vmatprep.subr.mxu0 0.0
        %720 = vmatpush2.msra.mxu0 0.0
        %721 = vmatprep.subr.mxu0 0.0
        %722 = vmatpush2.msra.mxu0 0.0
        %723 = vmatprep.subr.mxu0 0.0
        %724 = vmatpush2.msra.mxu0 0.0
        %725 = vmatprep.subr.mxu0 0.0
        %726 = vmatpush2.msra.mxu0 0.0
        %727 = vmatprep.subr.mxu0 0.0
        %728 = vmatpush2.msra.mxu0 0.0
        %729 = vmatprep.subr.mxu0 0.0
        %730 = vmatpush2.msra.mxu0 0.0
        %731 = vmatprep.subr.mxu0 0.0
        %732 = vmatpush2.msra.mxu0 0.0
        %733 = vmatprep.subr.mxu0 0.0
        %734 = vmatpush2.msra.mxu0 0.0
        %735 = vmatprep.subr.mxu0 0.0
        %736 = vmatpush2.msra.mxu0 0.0
        %737 = vmatprep.subr.mxu0 0.0
        %738 = vmatpush2.msra.mxu0 0.0
        %739 = vmatprep.subr.mxu0 0.0
        %740 = vmatpush2.msra.mxu0 0.0
        %741 = vmatprep.subr.mxu0 0.0
        %742 = vmatpush2.msra.mxu0 0.0
        %743 = vmatprep.subr.mxu0 0.0
        %744 = vmatpush2.msra.mxu0 0.0
        %745 = vmatprep.subr.mxu0 0.0
        %746 = vmatpush2.msra.mxu0 0.0
        %747 = vmatprep.subr.mxu0 0.0
        %748 = vmatpush2.msra.mxu0 0.0
        %749 = vmatprep.subr.mxu0 0.0
        %750 = vmatpush2.msra.mxu0 0.0
        %751 = vmatprep.mubr.f32.mxu0 0.0
        %752 = vmatmul.mubr.f32.gmra.mxu0 %v680
        %v753 = vpop.f32.mrf.mxu0
        %v754 = vadd.f32 0.0, %v753
        %v755 = vpop.f32.mrf.mxu0
        %v756 = vadd.f32 0.0, %v755
        %757 = vdwg.mxu0
        %vm758 = vcmask 130048
        %v760 = vsel %vm758, %v674, 0
        %762 = vmatprep.subr.mxu0 0.0
        %763 = vmatpush1.msra.mxu0 0.0
        %764 = vmatprep.subr.mxu0 0.0
        %765 = vmatpush1.msra.mxu0 0.0
        %766 = vmatprep.subr.mxu0 0.0
        %767 = vmatpush1.msra.mxu0 0.0
        %768 = vmatprep.subr.mxu0 0.0
        %769 = vmatpush1.msra.mxu0 0.0
        %770 = vmatprep.subr.mxu0 0.0
        %771 = vmatpush1.msra.mxu0 0.0
        %772 = vmatprep.subr.mxu0 0.0
        %773 = vmatpush1.msra.mxu0 0.0
        %774 = vmatprep.subr.mxu0 0.0
        %775 = vmatpush1.msra.mxu0 0.0
        %776 = vmatprep.subr.mxu0 0.0
        %777 = vmatpush1.msra.mxu0 0.0
        %778 = vmatprep.subr.mxu0 0.0
        %779 = vmatpush1.msra.mxu0 0.0
        %780 = vmatprep.subr.mxu0 0.0
        %781 = vmatpush1.msra.mxu0 0.0
        %782 = vmatprep.subr.mxu0 0.0
        %783 = vmatpush1.msra.mxu0 0.0
        %784 = vmatprep.subr.mxu0 0.0
        %785 = vmatpush1.msra.mxu0 0.0
        %786 = vmatprep.subr.mxu0 0.0
        %787 = vmatpush1.msra.mxu0 0.0
        %788 = vmatprep.subr.mxu0 0.0
        %789 = vmatpush1.msra.mxu0 0.0
        %790 = vmatprep.subr.mxu0 %v671
        %791 = vmatpush1.msra.mxu0 %v670
        %792 = vmatprep.subr.mxu0 %v669
        %793 = vmatpush1.msra.mxu0 %v668
        %794 = vmatprep.subr.mxu0 0.0
        %795 = vmatpush2.msra.mxu0 0.0
        %796 = vmatprep.subr.mxu0 0.0
        %797 = vmatpush2.msra.mxu0 0.0
        %798 = vmatprep.subr.mxu0 0.0
        %799 = vmatpush2.msra.mxu0 0.0
        %800 = vmatprep.subr.mxu0 0.0
        %801 = vmatpush2.msra.mxu0 0.0
        %802 = vmatprep.subr.mxu0 0.0
        %803 = vmatpush2.msra.mxu0 0.0
        %804 = vmatprep.subr.mxu0 0.0
        %805 = vmatpush2.msra.mxu0 0.0
        %806 = vmatprep.subr.mxu0 0.0
        %807 = vmatpush2.msra.mxu0 0.0
        %808 = vmatprep.subr.mxu0 0.0
        %809 = vmatpush2.msra.mxu0 0.0
        %810 = vmatprep.subr.mxu0 0.0
        %811 = vmatpush2.msra.mxu0 0.0
        %812 = vmatprep.subr.mxu0 0.0
        %813 = vmatpush2.msra.mxu0 0.0
        %814 = vmatprep.subr.mxu0 0.0
        %815 = vmatpush2.msra.mxu0 0.0
        %816 = vmatprep.subr.mxu0 0.0
        %817 = vmatpush2.msra.mxu0 0.0
        %818 = vmatprep.subr.mxu0 0.0
        %819 = vmatpush2.msra.mxu0 0.0
        %820 = vmatprep.subr.mxu0 0.0
        %821 = vmatpush2.msra.mxu0 0.0
        %822 = vmatprep.subr.mxu0 0.0
        %823 = vmatpush2.msra.mxu0 0.0
        %824 = vmatprep.subr.mxu0 0.0
        %825 = vmatpush2.msra.mxu0 0.0
        %826 = vmatprep.mubr.f32.mxu0 0.0
        %827 = vmatmul.mubr.f32.gmra.mxu0 %v760
        %v828 = vpop.f32.mrf.mxu0
        %v829 = vadd.f32 %v754, %v828
        %v830 = vpop.f32.mrf.mxu0
        %v831 = vadd.f32 %v756, %v830
        %832 = vdwg.mxu0
        %v833 = vld [vmem:[#allocation2] sm:$0x1]
        %835 = vset.pattern.permute.xlu0 0
        %836 = vperm.xlu0 %835, %v833
        %v837 = vpop.permute.xlu0 %836
        %v839 = vlaneseq
        %v840 = vshrl.u32 %v839, 7
        %v841 = vsub.s32 0, %v840
        %v842 = vrot.slane %v837, %v841
        %v843 = vadd.f32 %v829, %v842
        %v844 = vadd.f32 %v831, %v842
        %v847 = vcombine.low %v843, %v844
        %v849 = vunpack.c.l.s4 1966171168
        %v850 = vunpack.c.0.s8 %v849
        %v851 = vlaneseq
        %v852 = vshrl.u32 %v851, 7
        %v853 = vsub.s32 %v850, %v852
        %v854 = vrot.slane %v847, %v853
        %v856 = vunpack.c.l.s4 1966171168
        %v857 = vunpack.c.0.s8 %v856
        %v858 = vlaneseq
        %v859 = vshrl.u32 %v858, 7
        %v860 = vsub.s32 %v857, %v859
        %v861 = vrot.slane %v854, %v860
        %v863 = vlaneseq
        %vm864 = vcmp.ge.s32.totalorder %v863, 0
        %vm865 = vcmp.lt.s32.totalorder %v863, 256
        %vm866 = vmand %vm864, %vm865
        %867 = vst.msk [vmem:[%s344] sm:$0x3] %vm866, %v861
        %s868 = sand.u32 %s232, 1
        %s869 = scalar_lea.sflag [#allocation4], %s868
        %s870 = sand.u32 %s232, 1
        %s871 = smul.addr %s870, 2
        %s872 = scalar_lea.vmem [#allocation3], %s871
        // Predicated region
        $region57: #{tpu_custom_call.1} parent=55 // pred_check
          %p873 = pneg %p242
        $region58: #{tpu_custom_call.1} parent=55 // pred_check_branch
          %875 = sbr.rel (%p873) target = $region60
        $region59: #{tpu_custom_call.1} parent=55 // pred_region
          %s876 = smul.u32 2, %s25
          %s878 = ssub.s32 32, 32
          %879 = vsyncadd %s869, %s878
          %s880 = smul.addr %s876, 16
          %s881 = scalar_lea.hbm %s9, %s880
          %s883 = sshll.u32 %s872, 4
          %s884 = int_to_ptr.vmem [resolvable:$true] %s883
          %886 = dma.vmem_to_hbm [thread:$0]  %s884, 32, %s881, %s869
        $region60: #{tpu_custom_call.1} parent=55 // pred_fallthru
          _
      $region56: #{tpu_custom_call.1} parent=5 // pred_fallthru
        _
      %p887 = scmp.le.s32.totalorder 2, %s20
      // Predicated region
      $region61: #{tpu_custom_call.1} parent=5 // pred_check
        %p888 = pneg %p887
      $region62: #{tpu_custom_call.1} parent=5 // pred_check_branch
        %890 = sbr.rel (%p888) target = $region64
      $region63: #{tpu_custom_call.1} parent=5 // pred_region
        %s891 = ssub.s32 %s20, 2
        // Predicated region
        $region65: #{tpu_custom_call.1} parent=63 // pred_check
          %p892 = pneg %p248
        $region66: #{tpu_custom_call.1} parent=63 // pred_check_branch
          %894 = sbr.rel (%p892) target = $region68
        $region67: #{tpu_custom_call.1} parent=63 // pred_region
          %s895 = sand.u32 %s233, 1
          %s896 = scalar_lea.sflag [#allocation4], %s895
          %s897 = sand.u32 %s233, 1
          %s898 = smul.addr %s897, 2
          %s899 = scalar_lea.vmem [#allocation3], %s898
          %900 = dma.done %s896, 32
        $region68: #{tpu_custom_call.1} parent=63 // pred_fallthru
          _
      $region64: #{tpu_custom_call.1} parent=5 // pred_fallthru
        _
    $region6: #{tpu_custom_call.1} parent=1 // loop_footer
      %s24 = sadd.s32 1, %s20
    $region7: #{tpu_custom_call.1} parent=1 // loop_footer_branch
      %19 = sbr.rel target = $region3
    $region8: #{tpu_custom_call.1} parent=1 // loop_exit
      _
    %901 = vsyncpa [#allocation4], 1
    %s902 = scalar_lea.sflag [#allocation4], 1
    %903 = vsyncpa %s902, 1

</llo_original>
